<compile_context>
chip_gen: v5e
topology: v5e:2x2
jax: 0.10.0
libtpu: 0.0.40
codegen_flags: <defaults>
</compile_context>

<pallas_src>
import functools

import jax
import jax.numpy as jnp
from jax import lax
from jax.experimental import pallas as pl
from jax.experimental.pallas import tpu as pltpu


def _pick_tile(dim, candidates):
    """Largest candidate that evenly divides `dim`, else the full dim (always legal)."""
    for c in candidates:
        if dim % c == 0:
            return c
    return dim


def _vmem_limit_bytes():
    """Per-generation scoped-VMEM budget (half of physical, capped at 64 MiB)."""
    try:
        cap = int(pltpu.get_tpu_info().vmem_capacity_bytes)
    except Exception:
        cap = 64 << 20
    return int(min(cap // 2, 64 << 20))


def _heads_per_block(num_heads, head_dim):
    """Smallest head-group size whose column width is 128-lane aligned."""
    hb = 1
    while hb < num_heads and ((hb * head_dim) % 128 != 0 or num_heads % hb != 0):
        hb += 1
    # TODO(synk): head dims where no head group reaches 128-lane alignment (e.g. D=96
    # with H=3) would need full-row blocks + in-kernel column slicing instead.
    return hb


# -----------------------------------------------------------------------------
# Kernel 1: dense linear layer  y = x @ W + b   (W already (in, out)).
# Tiled over M (parallel), Nout (parallel) and K (arbitrary, f32 accumulator).
# -----------------------------------------------------------------------------
def _linear_kernel_acc(x_ref, w_ref, b_ref, o_ref, acc_ref):
    @pl.when(pl.program_id(2) == 0)
    def _():
        # Fold the bias into the accumulator init (saves a separate VPU pass later).
        acc_ref[...] = jnp.broadcast_to(b_ref[...].astype(jnp.float32), acc_ref.shape)

    acc_ref[...] += jnp.dot(x_ref[...].astype(jnp.bfloat16),
                            w_ref[...].astype(jnp.bfloat16),
                            preferred_element_type=jnp.float32)

    @pl.when(pl.program_id(2) == pl.num_programs(2) - 1)
    def _():
        o_ref[...] = acc_ref[...].astype(o_ref.dtype)


def _linear_kernel_single(x_ref, w_ref, b_ref, o_ref):
    # Single K step: no scratch accumulator / no extra VMEM round trip.
    acc = jnp.dot(x_ref[...].astype(jnp.bfloat16),
                  w_ref[...].astype(jnp.bfloat16),
                  preferred_element_type=jnp.float32)
    o_ref[...] = (acc + b_ref[...].astype(jnp.float32)).astype(o_ref.dtype)


def linear(x2d, w, b):
    """x2d: (M, K), w: (K, Nout), b: (Nout,) -> (M, Nout)."""
    M, K = x2d.shape
    Nout = w.shape[1]
    tm = _pick_tile(M, (512, 256, 128, 64, 32, 16, 8))
    tn = _pick_tile(Nout, (512, 256, 128))
    tk = _pick_tile(K, (512, 256, 128))
    kt = K // tk
    itemsize = x2d.dtype.itemsize
    cost = pl.CostEstimate(
        flops=2 * M * K * Nout,
        transcendentals=0,
        bytes_accessed=itemsize * (M * K + K * Nout + M * Nout + Nout))
    vmem = _vmem_limit_bytes()
    b2d = b.reshape(1, Nout)

    if kt == 1:
        return pl.pallas_call(
            _linear_kernel_single,
            out_shape=jax.ShapeDtypeStruct((M, Nout), x2d.dtype),
            grid=(M // tm, Nout // tn),
            in_specs=[
                pl.BlockSpec((tm, K), lambda i, j: (i, 0)),
                pl.BlockSpec((K, tn), lambda i, j: (0, j)),
                pl.BlockSpec((1, tn), lambda i, j: (0, j)),
            ],
            out_specs=pl.BlockSpec((tm, tn), lambda i, j: (i, j)),
            compiler_params=pltpu.CompilerParams(
                dimension_semantics=("parallel", "parallel"),
                vmem_limit_bytes=vmem),
            cost_estimate=cost,
        )(x2d, w, b2d)

    return pl.pallas_call(
        _linear_kernel_acc,
        out_shape=jax.ShapeDtypeStruct((M, Nout), x2d.dtype),
        grid=(M // tm, Nout // tn, kt),
        in_specs=[
            pl.BlockSpec((tm, tk), lambda i, j, k: (i, k)),
            pl.BlockSpec((tk, tn), lambda i, j, k: (k, j)),
            pl.BlockSpec((1, tn), lambda i, j, k: (0, j)),
        ],
        out_specs=pl.BlockSpec((tm, tn), lambda i, j, k: (i, j)),
        scratch_shapes=[pltpu.VMEM((tm, tn), jnp.float32)],
        compiler_params=pltpu.CompilerParams(
            dimension_semantics=("parallel", "parallel", "arbitrary"),
            vmem_limit_bytes=vmem),
        cost_estimate=cost,
    )(x2d, w, b2d)


# -----------------------------------------------------------------------------
# Kernel 2: per-(batch, head-group, q-tile) attention:
#   attn = softmax(q @ k^T + mask);  ctx = attn @ v     (scale folded into q weights)
# q/k/v are read directly out of the (B, N, 3C) QKV projection; ctx is written
# directly into its (B, N, C) slot -> no wrapper transposes. Heads are grouped so
# every qkv column slice / ctx write is 128-lane aligned (works for head_dim 64).
# -----------------------------------------------------------------------------
def _attn_kernel(q_ref, k_ref, v_ref, m_ref, ctx_ref, attn_ref, *,
                 head_dim, heads_per_block):
    D = head_dim
    m = m_ref[...].astype(jnp.float32)                                # (tq, N)
    ctx_parts = []
    for j in range(heads_per_block):
        qj = q_ref[:, j * D:(j + 1) * D].astype(jnp.bfloat16)         # (tq, D)
        kj = k_ref[:, j * D:(j + 1) * D].astype(jnp.bfloat16)         # (N,  D)
        # QK^T without materializing k.T: contract dim 1 of both operands on the MXU.
        s = lax.dot_general(qj, kj, (((1,), (1,)), ((), ())),
                            preferred_element_type=jnp.float32)       # (tq, N) f32
        s = s + m
        s = s - jnp.max(s, axis=-1, keepdims=True)
        e = jnp.exp(s)                                                # f32 (v5e: no bf16 EUP)
        inv_l = pl.reciprocal(jnp.sum(e, axis=-1, keepdims=True), approx=True)
        p = e * inv_l
        # attn is a module output, so the normalized matrix must be materialized.
        attn_ref[j, :, :] = p.astype(attn_ref.dtype)
        vj = v_ref[:, j * D:(j + 1) * D].astype(jnp.bfloat16)         # (N, D)
        ctx_parts.append(jnp.dot(p.astype(jnp.bfloat16), vj,
                                 preferred_element_type=jnp.float32))
    ctx_ref[...] = jnp.concatenate(ctx_parts, axis=-1).astype(ctx_ref.dtype)


def attention_core(qkv, mask, num_heads, head_dim):
    """qkv: (B, N, 3C); mask: (B, 1, N, N) f32 -> (ctx (B,N,C), attn (B,H,N,N))."""
    B, N, C3 = qkv.shape
    C = C3 // 3
    H, D = num_heads, head_dim
    hb = _heads_per_block(H, D)     # heads per grid step (lane alignment)
    G = H // hb                     # number of head groups
    W = hb * D                      # column width per group (multiple of 128)
    tq = _pick_tile(N, (256, 128, 64, 32, 16, 8))
    NQ = N // tq
    kern = functools.partial(_attn_kernel, head_dim=D, heads_per_block=hb)

    # Layout of the 3C axis is [qkv_index, head, head_dim]; with group width W the
    # block column indices are: q_g -> g, k_g -> G + g, v_g -> 2G + g.
    q_spec = pl.BlockSpec((None, tq, W), lambda b, g, qi: (b, qi, g))
    k_spec = pl.BlockSpec((None, N, W), lambda b, g, qi, G=G: (b, 0, G + g))
    v_spec = pl.BlockSpec((None, N, W), lambda b, g, qi, G=G: (b, 0, 2 * G + g))
    # Mask stays (B,1,N,N): the same (tq,N) rows are revisited across head groups.
    m_spec = pl.BlockSpec((None, None, tq, N), lambda b, g, qi: (b, 0, qi, 0))
    # Context written straight into (B, N, C) at group column offset (lane-dense).
    ctx_spec = pl.BlockSpec((None, tq, W), lambda b, g, qi: (b, qi, g))
    attn_spec = pl.BlockSpec((None, hb, tq, N), lambda b, g, qi: (b, g, qi, 0))

    itemsize = qkv.dtype.itemsize
    cost = pl.CostEstimate(
        flops=4 * B * H * N * N * D,                 # QK^T + PV
        transcendentals=B * H * N * N,               # exp
        bytes_accessed=itemsize * (B * N * 3 * C + B * N * C + B * H * N * N)
        + 4 * B * N * N)

    # TODO(synk): for very long sequences a flash-style (tq, tk) online-softmax tiling
    # would drop the (tq, N) working set further; full key rows are kept here because
    # the module must return the dense attention matrix anyway.
    return pl.pallas_call(
        kern,
        out_shape=(
            jax.ShapeDtypeStruct((B, N, C), qkv.dtype),
            jax.ShapeDtypeStruct((B, H, N, N), qkv.dtype),
        ),
        grid=(B, G, NQ),
        in_specs=[q_spec, k_spec, v_spec, m_spec],
        out_specs=(ctx_spec, attn_spec),
        compiler_params=pltpu.CompilerParams(
            dimension_semantics=("parallel", "parallel", "parallel"),
            vmem_limit_bytes=_vmem_limit_bytes()),
        cost_estimate=cost,
    )(qkv, qkv, qkv, mask)


# -----------------------------------------------------------------------------
# Full Attention forward (glue in plain JAX, hot paths in Pallas).
# -----------------------------------------------------------------------------
def attention_forward(x, mask, params, num_heads):
    B, N, C = x.shape
    D = C // num_heads
    scale = D ** (-0.5)

    # Fold 1/sqrt(D) into the q columns of the QKV weights/bias once (static weight
    # scaling) -> no per-element q*scale multiply inside the attention kernel.
    w_qkv = jnp.concatenate(
        [params["w_qkv"][:, :C] * scale, params["w_qkv"][:, C:]], axis=1)
    b_qkv = jnp.concatenate(
        [params["b_qkv"][:C] * scale, params["b_qkv"][C:]], axis=0)

    # QKV projection (qkv_bias=False -> zero bias gives identical result).
    qkv = linear(x.reshape(B * N, C), w_qkv, b_qkv).reshape(B, N, 3 * C)

    # Mask stays f32 (no bf16 round-trip for large additive biases).
    ctx, attn = attention_core(qkv, mask.astype(jnp.float32), num_heads, D)

    out = linear(ctx.reshape(B * N, C), params["w_proj"], params["b_proj"])
    return out.reshape(B, N, C), attn


# -----------------------------------------------------------------------------
# Pure-JAX reference for a sanity check.
# -----------------------------------------------------------------------------
def attention_reference(x, mask, params, num_heads):
    B, N, C = x.shape
    D = C // num_heads
    scale = D ** (-0.5)
    qkv = x.reshape(B * N, C) @ params["w_qkv"] + params["b_qkv"]
    qkv = qkv.reshape(B, N, 3, num_heads, D).transpose(2, 0, 3, 1, 4)
    q, k, v = qkv[0], qkv[1], qkv[2]
    attn = jnp.einsum("bhnd,bhmd->bhnm", q, k) * scale + mask
    attn = jax.nn.softmax(attn, axis=-1)
    out = jnp.einsum("bhnm,bhmd->bhnd", attn, v)
    out = out.transpose(0, 2, 1, 3).reshape(B, N, C)
    out = out.reshape(B * N, C) @ params["w_proj"] + params["b_proj"]
    return out.reshape(B, N, C), attn


if __name__ == "__main__":
    # ViT-typical head_dim = 64 (exercises the lane-aligned head-grouping path),
    # N multiple of 8, M = B*N multiple of 8.
    B, N, C, H = 2, 64, 256, 4

    key = jax.random.PRNGKey(0)
    kx, km, k1, k2, k3 = jax.random.split(key, 5)

    x = jax.random.normal(kx, (B, N, C), dtype=jnp.float32)
    mask = 0.1 * jax.random.normal(km, (B, 1, N, N), dtype=jnp.float32)

    params = {
        "w_qkv": 0.02 * jax.random.normal(k1, (C, 3 * C), dtype=jnp.float32),
        "b_qkv": jnp.zeros((3 * C,), dtype=jnp.float32),   # qkv_bias=False
        "w_proj": 0.02 * jax.random.normal(k2, (C, C), dtype=jnp.float32),
        "b_proj": 0.01 * jax.random.normal(k3, (C,), dtype=jnp.float32),
    }

    out, attn = attention_forward(x, mask, params, H)
    jax.block_until_ready((out, attn))

    ref_out, ref_attn = attention_reference(x, mask, params, H)
    assert jnp.allclose(out, ref_out, atol=2e-2, rtol=2e-2), "output mismatch"
    assert jnp.allclose(attn, ref_attn, atol=2e-2, rtol=2e-2), "attn mismatch"

    print("KERNEL_OK")
</pallas_src>

<mosaic_0001>
module attributes {stable_mosaic.version = 11 : i64} {
  func.func @_linear_kernel_single(%arg0: i32, %arg1: i32, %arg2: memref<128x256xf32, #tpu.memory_space<vmem>>, %arg3: memref<256x256xf32, #tpu.memory_space<vmem>>, %arg4: memref<1x256xf32, #tpu.memory_space<vmem>>, %arg5: memref<128x256xf32, #tpu.memory_space<vmem>>) attributes {dimension_semantics = [#tpu.dimension_semantics<parallel>, #tpu.dimension_semantics<parallel>], iteration_bounds = array<i64: 1, 3>, scalar_prefetch = 0 : i64, scratch_operands = 0 : i64, tpu.core_type = #tpu.core_type<tc>, window_params = [{transform_indices = @transform_0, window_bounds = array<i64: 128, 256>}, {transform_indices = @transform_1, window_bounds = array<i64: 256, 256>}, {transform_indices = @transform_2, window_bounds = array<i64: 1, 256>}, {transform_indices = @transform_3, window_bounds = array<i64: 128, 256>}]} {
    %c0 = arith.constant 0 : index
    %c0_0 = arith.constant 0 : index
    %0 = vector.load %arg2[%c0, %c0_0] : memref<128x256xf32, #tpu.memory_space<vmem>>, vector<128x256xf32>
    %1 = arith.truncf %0 : vector<128x256xf32> to vector<128x256xbf16>
    %c0_1 = arith.constant 0 : index
    %c0_2 = arith.constant 0 : index
    %2 = vector.load %arg3[%c0_1, %c0_2] : memref<256x256xf32, #tpu.memory_space<vmem>>, vector<256x256xf32>
    %3 = arith.truncf %2 : vector<256x256xf32> to vector<256x256xbf16>
    %cst = arith.constant dense<0.000000e+00> : vector<128x256xf32>
    %4 = tpu.matmul %1, %3, %cst {dimension_numbers = #tpu.dot_dimension_numbers<[1], [0], [0], [1], [0, 0, 1, 1], [], []>} : vector<128x256xbf16>, vector<256x256xbf16>, vector<128x256xf32> -> vector<128x256xf32>
    %c0_3 = arith.constant 0 : index
    %c0_4 = arith.constant 0 : index
    %5 = vector.load %arg4[%c0_3, %c0_4] : memref<1x256xf32, #tpu.memory_space<vmem>>, vector<1x256xf32>
    %6 = vector.broadcast %5 : vector<1x256xf32> to vector<128x256xf32>
    %7 = arith.addf %4, %6 : vector<128x256xf32>
    %c0_5 = arith.constant 0 : index
    %c0_6 = arith.constant 0 : index
    %8 = vector.load %arg5[%c0_5, %c0_6] : memref<128x256xf32, #tpu.memory_space<vmem>>, vector<128x256xf32>
    tpu.vector_store %arg5[%c0_5, %c0_6], %7 {strides = array<i32>} : memref<128x256xf32, #tpu.memory_space<vmem>>, vector<128x256xf32>,
    return
  }
  func.func @transform_0(%arg0: i32, %arg1: i32) -> (i32, i32) {
    %c0_i32 = arith.constant 0 : i32
    %c0_i32_0 = arith.constant 0 : i32
    return %arg0, %c0_i32 : i32, i32
  }
  func.func @transform_1(%arg0: i32, %arg1: i32) -> (i32, i32) {
    %c0_i32 = arith.constant 0 : i32
    %c0_i32_0 = arith.constant 0 : i32
    return %c0_i32, %arg1 : i32, i32
  }
  func.func @transform_2(%arg0: i32, %arg1: i32) -> (i32, i32) {
    %c0_i32 = arith.constant 0 : i32
    %c0_i32_0 = arith.constant 0 : i32
    return %c0_i32, %arg1 : i32, i32
  }
  func.func @transform_3(%arg0: i32, %arg1: i32) -> (i32, i32) {
    %c0_i32 = arith.constant 0 : i32
    return %arg0, %arg1 : i32, i32
  }
}

</mosaic_0001>

<llo_original>
// kernel: tpu_custom_call.1
$region0: #{tpu_custom_call.1}
  #allocation0 [shape = 'u32[]', space=smem, size = 0x4, offset = 0x4, fixed_abs, tag = 'smem constant byte address 0x4 - core index']
  #allocation1 [shape = 'u32[72,128]{1,0:T(1,128)}', space=vmem, size = 0x9000, scoped, tag = 'internal scratch']
  %s0 = inlined_call_operand.hbm [shape: f32[128,256], index: 0, kind: input, shape index: {}]
  %s1 = inlined_call_operand.hbm [shape: f32[256,768], index: 1, kind: input, shape index: {}]
  %s2 = inlined_call_operand.hbm [shape: f32[1,768], index: 2, kind: input, shape index: {}]
  %s3 = inlined_call_operand.hbm [shape: f32[128,768], index: 3, kind: output, shape index: {}]
  %s4 = sld [smem:[#allocation0]]
  $region57: #{tpu_custom_call.1} parent=0
    _
  %s6 = ssub.s32 1, %s4
  %s7 = scalar_select 0, %s6, %s4
  $region1: #{tpu_custom_call.1} parent=0
    #allocation2 [shape = 'u8[131072]{0}', space=vmem, size = 0x20000, scoped, tag = 'input window, operand 0, single buffered']
    #allocation3 [shape = 's32[2]{0}', space=sflag, size = 0x8, scoped, tag = 'scoped memory for tpu_custom_call.1']
    #allocation4 [shape = 's32[2]{0}', space=sflag, size = 0x8, scoped, tag = 'scoped memory for tpu_custom_call.1']
    #allocation5 [shape = 'u8[524288]{0}', space=vmem, size = 0x80000, scoped, tag = 'input window, operand 1']
    #allocation6 [shape = 's32[2]{0}', space=sflag, size = 0x8, scoped, tag = 'scoped memory for tpu_custom_call.1']
    #allocation7 [shape = 'u8[2048]{0}', space=vmem, size = 0x800, scoped, tag = 'input window, operand 2']
    #allocation8 [shape = 'u8[262144]{0}', space=vmem, size = 0x40000, scoped, tag = 'output window, operand 0']
    %8 = vsyncpa [#allocation3], 0
    %9 = vsyncpa [#allocation6], 0
    %s10 = scalar_lea.sflag [#allocation6], 1
    %11 = vsyncpa %s10, 0
    %12 = vsyncpa [#allocation4], 0
    %s13 = scalar_lea.sflag [#allocation4], 1
    %14 = vsyncpa %s13, 0
    loop: start=0, step=1, limit=5
    $region2: #{tpu_custom_call.1} parent=1 // loop_pre_header
      _
    $region3: #{tpu_custom_call.1} parent=1 // loop_header
      %s16 = sphi 0, %s20
      %p17 = scmp.ge.s32.totalorder %s16, 5
      %s23 = sphi 0, %s35
      %s24 = sphi 0, %s31
      %s25 = sphi 0, %s23
      %s26 = sphi 0, %s24
      %s27 = sphi 0, %s25
      %s28 = sphi 0, %s26
      %s38 = sphi 0, %s40
      %s41 = sphi 0, %s38
      %s42 = sphi 0, %s41
      %s58 = sphi 0, %s42
      %s64 = sphi 0, %s66
      %s67 = sphi 0, %s64
      %s68 = sphi 0, %s67
      %s84 = sphi 0, %s68
      %s90 = sphi 0, %s92
      %s93 = sphi 0, %s90
      %s94 = sphi 0, %s93
      %s110 = sphi 0, %s94
      %s118 = sphi 0, %s120
      %s121 = sphi 0, %s118
      %s122 = sphi 0, %s121
      %s138 = sphi 0, %s122
    $region4: #{tpu_custom_call.1} parent=1 // loop_header_branch
      %19 = sbr.rel (%p17) target = $region8
    $region5: #{tpu_custom_call.1} parent=1 // loop_body
      %s21 = ssub.s32 %s16, 1
      %s22 = ssub.s32 %s16, 2
      %s29 = sadd.s32 1, %s24
      %p30 = scmp.ge.s32.totalorder %s29, 3
      %s31 = scalar_select %p30, 0, %s29
      %s32 = sadd.s32 1, %s23
      %s33 = scalar_select %p30, %s32, %s23
      %p34 = scmp.ge.s32.totalorder %s33, 1
      %s35 = scalar_select %p34, 0, %s33
      %s36 = ssub.s32 %s23, %s35
      %p37 = scmp.eq.s32.totalorder %s36, 0
      %s39 = sadd.s32 %s38, 1
      %s40 = scalar_select %p37, %s38, %s39
      %p43 = pneg %p37
      %p44 = scmp.eq.s32.totalorder %s16, 2
      %p45 = por %p43, %p44
      %p46 = scmp.ne.s32.totalorder %s38, %s41
      %p47 = scmp.eq.s32.totalorder %s16, 0
      %p48 = por %p46, %p47
      %p49 = scmp.ne.s32.totalorder %s38, %s41
      %p50 = scmp.eq.s32.totalorder %s21, 2
      %p51 = por %p49, %p50
      %p52 = scmp.ne.s32.totalorder %s41, %s42
      %p53 = scmp.eq.s32.totalorder %s21, 0
      %p54 = por %p52, %p53
      %p55 = scmp.ne.s32.totalorder %s41, %s42
      %p56 = scmp.eq.s32.totalorder %s22, 2
      %p57 = por %p55, %p56
      %p59 = scmp.ne.s32.totalorder %s42, %s58
      %p60 = scmp.eq.s32.totalorder %s22, 0
      %p61 = por %p59, %p60
      %s62 = ssub.s32 %s24, %s31
      %p63 = scmp.eq.s32.totalorder %s62, 0
      %s65 = sadd.s32 %s64, 1
      %s66 = scalar_select %p63, %s64, %s65
      %p69 = pneg %p63
      %p70 = scmp.eq.s32.totalorder %s16, 2
      %p71 = por %p69, %p70
      %p72 = scmp.ne.s32.totalorder %s64, %s67
      %p73 = scmp.eq.s32.totalorder %s16, 0
      %p74 = por %p72, %p73
      %p75 = scmp.ne.s32.totalorder %s64, %s67
      %p76 = scmp.eq.s32.totalorder %s21, 2
      %p77 = por %p75, %p76
      %p78 = scmp.ne.s32.totalorder %s67, %s68
      %p79 = scmp.eq.s32.totalorder %s21, 0
      %p80 = por %p78, %p79
      %p81 = scmp.ne.s32.totalorder %s67, %s68
      %p82 = scmp.eq.s32.totalorder %s22, 2
      %p83 = por %p81, %p82
      %p85 = scmp.ne.s32.totalorder %s68, %s84
      %p86 = scmp.eq.s32.totalorder %s22, 0
      %p87 = por %p85, %p86
      %s88 = ssub.s32 %s24, %s31
      %p89 = scmp.eq.s32.totalorder %s88, 0
      %s91 = sadd.s32 %s90, 1
      %s92 = scalar_select %p89, %s90, %s91
      %p95 = pneg %p89
      %p96 = scmp.eq.s32.totalorder %s16, 2
      %p97 = por %p95, %p96
      %p98 = scmp.ne.s32.totalorder %s90, %s93
      %p99 = scmp.eq.s32.totalorder %s16, 0
      %p100 = por %p98, %p99
      %p101 = scmp.ne.s32.totalorder %s90, %s93
      %p102 = scmp.eq.s32.totalorder %s21, 2
      %p103 = por %p101, %p102
      %p104 = scmp.ne.s32.totalorder %s93, %s94
      %p105 = scmp.eq.s32.totalorder %s21, 0
      %p106 = por %p104, %p105
      %p107 = scmp.ne.s32.totalorder %s93, %s94
      %p108 = scmp.eq.s32.totalorder %s22, 2
      %p109 = por %p107, %p108
      %p111 = scmp.ne.s32.totalorder %s94, %s110
      %p112 = scmp.eq.s32.totalorder %s22, 0
      %p113 = por %p111, %p112
      %s114 = ssub.s32 %s23, %s35
      %s115 = ssub.s32 %s24, %s31
      %s116 = sor.u32 %s114, %s115
      %p117 = scmp.eq.s32.totalorder %s116, 0
      %s119 = sadd.s32 %s118, 1
      %s120 = scalar_select %p117, %s118, %s119
      %p123 = pneg %p117
      %p124 = scmp.eq.s32.totalorder %s16, 2
      %p125 = por %p123, %p124
      %p126 = scmp.ne.s32.totalorder %s118, %s121
      %p127 = scmp.eq.s32.totalorder %s16, 0
      %p128 = por %p126, %p127
      %p129 = scmp.ne.s32.totalorder %s118, %s121
      %p130 = scmp.eq.s32.totalorder %s21, 2
      %p131 = por %p129, %p130
      %p132 = scmp.ne.s32.totalorder %s121, %s122
      %p133 = scmp.eq.s32.totalorder %s21, 0
      %p134 = por %p132, %p133
      %p135 = scmp.ne.s32.totalorder %s121, %s122
      %p136 = scmp.eq.s32.totalorder %s22, 2
      %p137 = por %p135, %p136
      %p139 = scmp.ne.s32.totalorder %s122, %s138
      %p140 = scmp.eq.s32.totalorder %s22, 0
      %p141 = por %p139, %p140
      %p142 = scmp.le.s32.totalorder 1, %s16
      %p143 = scmp.lt.s32.totalorder %s16, 4
      %p144 = pnand %p142, %p143
      %p145 = pneg %p144
      // Predicated region
      $region9: #{tpu_custom_call.1} parent=5 // pred_check
        _
      $region10: #{tpu_custom_call.1} parent=5 // pred_check_branch
        %147 = sbr.rel (%p144) target = $region12
      $region11: #{tpu_custom_call.1} parent=5 // pred_region
        %s148 = ssub.s32 %s16, 1
        // Predicated region
        $region13: #{tpu_custom_call.1} parent=11 // pred_check
          %p149 = pneg %p54
        $region14: #{tpu_custom_call.1} parent=11 // pred_check_branch
          %151 = sbr.rel (%p149) target = $region16
        $region15: #{tpu_custom_call.1} parent=11 // pred_region
          %s152 = smul.u32 16, %s25
          %154 = vsyncadd [#allocation3], 0
          %s155 = smul.addr %s152, 2
          %s156 = smul.addr %s155, 8
          %s157 = scalar_lea.hbm %s0, %s156
          %s158 = sshll.u32 %s157, 4
          %s159 = int_to_ptr.hbm [resolvable:$true] %s158
          %s160 = sshll.u32 [#allocation2], 4
          %s161 = int_to_ptr.vmem [resolvable:$true] %s160
          %166 = dma.hbm_to_vmem [thread:$0]  %s159, 4096, %s161, [#allocation3], 256, 256, 16
        $region16: #{tpu_custom_call.1} parent=11 // pred_fallthru
          _
      $region12: #{tpu_custom_call.1} parent=5 // pred_fallthru
        _
      %p167 = scmp.lt.s32.totalorder %s16, 3
      // Predicated region
      $region17: #{tpu_custom_call.1} parent=5 // pred_check
        %p168 = pneg %p167
      $region18: #{tpu_custom_call.1} parent=5 // pred_check_branch
        %170 = sbr.rel (%p168) target = $region20
      $region19: #{tpu_custom_call.1} parent=5 // pred_region
        // Predicated region
        $region21: #{tpu_custom_call.1} parent=19 // pred_check
          %p171 = pneg %p74
        $region22: #{tpu_custom_call.1} parent=19 // pred_check_branch
          %173 = sbr.rel (%p171) target = $region24
        $region23: #{tpu_custom_call.1} parent=19 // pred_region
          %s174 = sand.u32 %s16, 1
          %s175 = scalar_lea.sflag [#allocation6], %s174
          %s176 = sand.u32 %s64, 1
          %s177 = smul.addr %s176, 512
          %s178 = scalar_lea.vmem [#allocation5], %s177
          %s179 = smul.u32 2, %s24
          %181 = vsyncadd %s175, 0
          %s182 = smul.addr %s179, 8
          %s183 = scalar_lea.hbm %s1, %s182
          %s184 = sshll.u32 %s183, 4
          %s185 = int_to_ptr.hbm [resolvable:$true] %s184
          %s186 = sshll.u32 %s178, 4
          %s187 = int_to_ptr.vmem [resolvable:$true] %s186
          %192 = dma.hbm_to_vmem [thread:$0]  %s185, 8192, %s187, %s175, 768, 256, 16
        $region24: #{tpu_custom_call.1} parent=19 // pred_fallthru
          _
        // Predicated region
        $region25: #{tpu_custom_call.1} parent=19 // pred_check
          %p193 = pneg %p100
        $region26: #{tpu_custom_call.1} parent=19 // pred_check_branch
          %195 = sbr.rel (%p193) target = $region28
        $region27: #{tpu_custom_call.1} parent=19 // pred_region
          %s196 = sand.u32 %s16, 1
          %s197 = scalar_lea.sflag [#allocation6], %s196
          %s198 = sand.u32 %s90, 1
          %s199 = smul.addr %s198, 2
          %s200 = scalar_lea.vmem [#allocation7], %s199
          %s201 = smul.u32 2, %s24
          %203 = vsyncadd %s197, 0
          %s204 = scalar_lea.hbm %s2, %s201
          %s206 = sshll.u32 %s204, 4
          %s207 = int_to_ptr.hbm [resolvable:$true] %s206
          %s208 = sshll.u32 %s200, 4
          %s209 = int_to_ptr.vmem [resolvable:$true] %s208
          %211 = dma.hbm_to_vmem [thread:$0]  %s207, 32, %s209, %s197
        $region28: #{tpu_custom_call.1} parent=19 // pred_fallthru
          _
      $region20: #{tpu_custom_call.1} parent=5 // pred_fallthru
        _
      %p212 = scmp.le.s32.totalorder 1, %s16
      %p213 = scmp.lt.s32.totalorder %s16, 4
      %p214 = pnand %p212, %p213
      %p215 = pneg %p214
      // Predicated region
      $region29: #{tpu_custom_call.1} parent=5 // pred_check
        _
      $region30: #{tpu_custom_call.1} parent=5 // pred_check_branch
        %217 = sbr.rel (%p214) target = $region32
      $region31: #{tpu_custom_call.1} parent=5 // pred_region
        %s218 = ssub.s32 %s16, 1
        // Predicated region
        $region33: #{tpu_custom_call.1} parent=31 // pred_check
          %p219 = pneg %p54
        $region34: #{tpu_custom_call.1} parent=31 // pred_check_branch
          %221 = sbr.rel (%p219) target = $region36
        $region35: #{tpu_custom_call.1} parent=31 // pred_region
          %223 = dma.done [#allocation3], 4096
        $region36: #{tpu_custom_call.1} parent=31 // pred_fallthru
          _
        %s224 = sand.u32 %s21, 1
        %s225 = scalar_lea.sflag [#allocation6], %s224
        %s226 = sand.u32 %s67, 1
        %s227 = smul.addr %s226, 512
        %s228 = scalar_lea.vmem [#allocation5], %s227
        // Predicated region
        $region37: #{tpu_custom_call.1} parent=31 // pred_check
          %p229 = pneg %p80
        $region38: #{tpu_custom_call.1} parent=31 // pred_check_branch
          %231 = sbr.rel (%p229) target = $region40
        $region39: #{tpu_custom_call.1} parent=31 // pred_region
          %233 = dma.done %s225, 8192
        $region40: #{tpu_custom_call.1} parent=31 // pred_fallthru
          _
        %s234 = sand.u32 %s21, 1
        %s235 = scalar_lea.sflag [#allocation6], %s234
        %s236 = sand.u32 %s93, 1
        %s237 = smul.addr %s236, 2
        %s238 = scalar_lea.vmem [#allocation7], %s237
        // Predicated region
        $region41: #{tpu_custom_call.1} parent=31 // pred_check
          %p239 = pneg %p106
        $region42: #{tpu_custom_call.1} parent=31 // pred_check_branch
          %241 = sbr.rel (%p239) target = $region44
        $region43: #{tpu_custom_call.1} parent=31 // pred_region
          %243 = dma.done %s235, 32
        $region44: #{tpu_custom_call.1} parent=31 // pred_fallthru
          _
        %p244 = pneg %p54
        %p245 = pneg %p51
        %s246 = sand.u32 %s21, 1
        %s247 = scalar_lea.sflag [#allocation6], %s246
        %s248 = sand.u32 %s67, 1
        %s249 = smul.addr %s248, 512
        %s250 = scalar_lea.vmem [#allocation5], %s249
        %p251 = pneg %p80
        %p252 = pneg %p77
        %s253 = sand.u32 %s21, 1
        %s254 = scalar_lea.sflag [#allocation6], %s253
        %s255 = sand.u32 %s93, 1
        %s256 = smul.addr %s255, 2
        %s257 = scalar_lea.vmem [#allocation7], %s256
        %p258 = pneg %p106
        %p259 = pneg %p103
        %p260 = pneg %p134
        %p261 = pneg %p131
        %s262 = sand.u32 %s121, 1
        %s263 = scalar_lea.sflag [#allocation4], %s262
        %s264 = sand.u32 %s121, 1
        %s265 = smul.addr %s264, 256
        %s266 = scalar_lea.vmem [#allocation8], %s265
        %s267 = smul.u32 16, %s25
        %s268 = smul.u32 2, %s26
        %s269 = smul.u32 2, %s26
        %s270 = smul.u32 16, %s25
        %s271 = smul.u32 2, %s26
        %v272 = vld [vmem:[#allocation2] sm:$0xff]
        %v273 = vld [vmem:[#allocation2 + $0x8] sm:$0xff]
        %v274 = vld [vmem:[#allocation2 + $0x10] sm:$0xff]
        %v275 = vld [vmem:[#allocation2 + $0x18] sm:$0xff]
        %v276 = vld [vmem:[#allocation2 + $0x20] sm:$0xff]
        %v277 = vld [vmem:[#allocation2 + $0x28] sm:$0xff]
        %v278 = vld [vmem:[#allocation2 + $0x30] sm:$0xff]
        %v279 = vld [vmem:[#allocation2 + $0x38] sm:$0xff]
        %v280 = vld [vmem:[#allocation2 + $0x40] sm:$0xff]
        %v281 = vld [vmem:[#allocation2 + $0x48] sm:$0xff]
        %v282 = vld [vmem:[#allocation2 + $0x50] sm:$0xff]
        %v283 = vld [vmem:[#allocation2 + $0x58] sm:$0xff]
        %v284 = vld [vmem:[#allocation2 + $0x60] sm:$0xff]
        %v285 = vld [vmem:[#allocation2 + $0x68] sm:$0xff]
        %v286 = vld [vmem:[#allocation2 + $0x70] sm:$0xff]
        %v287 = vld [vmem:[#allocation2 + $0x78] sm:$0xff]
        %v288 = vld [vmem:[#allocation2 + $0x80] sm:$0xff]
        %v289 = vld [vmem:[#allocation2 + $0x88] sm:$0xff]
        %v290 = vld [vmem:[#allocation2 + $0x90] sm:$0xff]
        %v291 = vld [vmem:[#allocation2 + $0x98] sm:$0xff]
        %v292 = vld [vmem:[#allocation2 + $0xa0] sm:$0xff]
        %v293 = vld [vmem:[#allocation2 + $0xa8] sm:$0xff]
        %v294 = vld [vmem:[#allocation2 + $0xb0] sm:$0xff]
        %v295 = vld [vmem:[#allocation2 + $0xb8] sm:$0xff]
        %v296 = vld [vmem:[#allocation2 + $0xc0] sm:$0xff]
        %v297 = vld [vmem:[#allocation2 + $0xc8] sm:$0xff]
        %v298 = vld [vmem:[#allocation2 + $0xd0] sm:$0xff]
        %v299 = vld [vmem:[#allocation2 + $0xd8] sm:$0xff]
        %v300 = vld [vmem:[#allocation2 + $0xe0] sm:$0xff]
        %v301 = vld [vmem:[#allocation2 + $0xe8] sm:$0xff]
        %v302 = vld [vmem:[#allocation2 + $0xf0] sm:$0xff]
        %v303 = vld [vmem:[#allocation2 + $0xf8] sm:$0xff]
        %v304 = vpack.c.bf16 %v274, %v272
        %v305 = vpack.c.bf16 %v275, %v273
        %v306 = vpack.c.bf16 %v278, %v276
        %v307 = vpack.c.bf16 %v279, %v277
        %v308 = vpack.c.bf16 %v282, %v280
        %v309 = vpack.c.bf16 %v283, %v281
        %v310 = vpack.c.bf16 %v286, %v284
        %v311 = vpack.c.bf16 %v287, %v285
        %v312 = vpack.c.bf16 %v290, %v288
        %v313 = vpack.c.bf16 %v291, %v289
        %v314 = vpack.c.bf16 %v294, %v292
        %v315 = vpack.c.bf16 %v295, %v293
        %v316 = vpack.c.bf16 %v298, %v296
        %v317 = vpack.c.bf16 %v299, %v297
        %v318 = vpack.c.bf16 %v302, %v300
        %v319 = vpack.c.bf16 %v303, %v301
        %v320 = vld [vmem:[%s228] sm:$0xff]
        %v321 = vld [vmem:[%s228 + $0x8] sm:$0xff]
        %v322 = vld [vmem:[%s228 + $0x10] sm:$0xff]
        %v323 = vld [vmem:[%s228 + $0x18] sm:$0xff]
        %v324 = vld [vmem:[%s228 + $0x20] sm:$0xff]
        %v325 = vld [vmem:[%s228 + $0x28] sm:$0xff]
        %v326 = vld [vmem:[%s228 + $0x30] sm:$0xff]
        %v327 = vld [vmem:[%s228 + $0x38] sm:$0xff]
        %v328 = vld [vmem:[%s228 + $0x40] sm:$0xff]
        %v329 = vld [vmem:[%s228 + $0x48] sm:$0xff]
        %v330 = vld [vmem:[%s228 + $0x50] sm:$0xff]
        %v331 = vld [vmem:[%s228 + $0x58] sm:$0xff]
        %v332 = vld [vmem:[%s228 + $0x60] sm:$0xff]
        %v333 = vld [vmem:[%s228 + $0x68] sm:$0xff]
        %v334 = vld [vmem:[%s228 + $0x70] sm:$0xff]
        %v335 = vld [vmem:[%s228 + $0x78] sm:$0xff]
        %v336 = vld [vmem:[%s228 + $0x80] sm:$0xff]
        %v337 = vld [vmem:[%s228 + $0x88] sm:$0xff]
        %v338 = vld [vmem:[%s228 + $0x90] sm:$0xff]
        %v339 = vld [vmem:[%s228 + $0x98] sm:$0xff]
        %v340 = vld [vmem:[%s228 + $0xa0] sm:$0xff]
        %v341 = vld [vmem:[%s228 + $0xa8] sm:$0xff]
        %v342 = vld [vmem:[%s228 + $0xb0] sm:$0xff]
        %v343 = vld [vmem:[%s228 + $0xb8] sm:$0xff]
        %v344 = vld [vmem:[%s228 + $0xc0] sm:$0xff]
        %v345 = vld [vmem:[%s228 + $0xc8] sm:$0xff]
        %v346 = vld [vmem:[%s228 + $0xd0] sm:$0xff]
        %v347 = vld [vmem:[%s228 + $0xd8] sm:$0xff]
        %v348 = vld [vmem:[%s228 + $0xe0] sm:$0xff]
        %v349 = vld [vmem:[%s228 + $0xe8] sm:$0xff]
        %v350 = vld [vmem:[%s228 + $0xf0] sm:$0xff]
        %v351 = vld [vmem:[%s228 + $0xf8] sm:$0xff]
        %v352 = vld [vmem:[%s228 + $0x100] sm:$0xff]
        %v353 = vld [vmem:[%s228 + $0x108] sm:$0xff]
        %v354 = vld [vmem:[%s228 + $0x110] sm:$0xff]
        %v355 = vld [vmem:[%s228 + $0x118] sm:$0xff]
        %v356 = vld [vmem:[%s228 + $0x120] sm:$0xff]
        %v357 = vld [vmem:[%s228 + $0x128] sm:$0xff]
        %v358 = vld [vmem:[%s228 + $0x130] sm:$0xff]
        %v359 = vld [vmem:[%s228 + $0x138] sm:$0xff]
        %v360 = vld [vmem:[%s228 + $0x140] sm:$0xff]
        %v361 = vld [vmem:[%s228 + $0x148] sm:$0xff]
        %v362 = vld [vmem:[%s228 + $0x150] sm:$0xff]
        %v363 = vld [vmem:[%s228 + $0x158] sm:$0xff]
        %v364 = vld [vmem:[%s228 + $0x160] sm:$0xff]
        %v365 = vld [vmem:[%s228 + $0x168] sm:$0xff]
        %v366 = vld [vmem:[%s228 + $0x170] sm:$0xff]
        %v367 = vld [vmem:[%s228 + $0x178] sm:$0xff]
        %v368 = vld [vmem:[%s228 + $0x180] sm:$0xff]
        %v369 = vld [vmem:[%s228 + $0x188] sm:$0xff]
        %v370 = vld [vmem:[%s228 + $0x190] sm:$0xff]
        %v371 = vld [vmem:[%s228 + $0x198] sm:$0xff]
        %v372 = vld [vmem:[%s228 + $0x1a0] sm:$0xff]
        %v373 = vld [vmem:[%s228 + $0x1a8] sm:$0xff]
        %v374 = vld [vmem:[%s228 + $0x1b0] sm:$0xff]
        %v375 = vld [vmem:[%s228 + $0x1b8] sm:$0xff]
        %v376 = vld [vmem:[%s228 + $0x1c0] sm:$0xff]
        %v377 = vld [vmem:[%s228 + $0x1c8] sm:$0xff]
        %v378 = vld [vmem:[%s228 + $0x1d0] sm:$0xff]
        %v379 = vld [vmem:[%s228 + $0x1d8] sm:$0xff]
        %v380 = vld [vmem:[%s228 + $0x1e0] sm:$0xff]
        %v381 = vld [vmem:[%s228 + $0x1e8] sm:$0xff]
        %v382 = vld [vmem:[%s228 + $0x1f0] sm:$0xff]
        %v383 = vld [vmem:[%s228 + $0x1f8] sm:$0xff]
        %v384 = vpack.c.bf16 %v322, %v320
        %v385 = vpack.c.bf16 %v323, %v321
        %v386 = vpack.c.bf16 %v326, %v324
        %v387 = vpack.c.bf16 %v327, %v325
        %v388 = vpack.c.bf16 %v330, %v328
        %v389 = vpack.c.bf16 %v331, %v329
        %v390 = vpack.c.bf16 %v334, %v332
        %v391 = vpack.c.bf16 %v335, %v333
        %v392 = vpack.c.bf16 %v338, %v336
        %v393 = vpack.c.bf16 %v339, %v337
        %v394 = vpack.c.bf16 %v342, %v340
        %v395 = vpack.c.bf16 %v343, %v341
        %v396 = vpack.c.bf16 %v346, %v344
        %v397 = vpack.c.bf16 %v347, %v345
        %v398 = vpack.c.bf16 %v350, %v348
        %v399 = vpack.c.bf16 %v351, %v349
        %v400 = vpack.c.bf16 %v354, %v352
        %v401 = vpack.c.bf16 %v355, %v353
        %v402 = vpack.c.bf16 %v358, %v356
        %v403 = vpack.c.bf16 %v359, %v357
        %v404 = vpack.c.bf16 %v362, %v360
        %v405 = vpack.c.bf16 %v363, %v361
        %v406 = vpack.c.bf16 %v366, %v364
        %v407 = vpack.c.bf16 %v367, %v365
        %v408 = vpack.c.bf16 %v370, %v368
        %v409 = vpack.c.bf16 %v371, %v369
        %v410 = vpack.c.bf16 %v374, %v372
        %v411 = vpack.c.bf16 %v375, %v373
        %v412 = vpack.c.bf16 %v378, %v376
        %v413 = vpack.c.bf16 %v379, %v377
        %v414 = vpack.c.bf16 %v382, %v380
        %v415 = vpack.c.bf16 %v383, %v381
        %v416 = vld [vmem:[%s238] sm:$0x3]
        %v418 = vperm.slane %v416, 0
        %v419 = vperm.slane %v416, 1
        %422 = vmatpush.bf16.msra.mxu0 %v398
        %423 = vmatpush.bf16.msra.mxu0 %v396
        %424 = vmatpush.bf16.msra.mxu0 %v394
        %425 = vmatpush.bf16.msra.mxu0 %v392
        %426 = vmatpush.bf16.msra.mxu0 %v390
        %427 = vmatpush.bf16.msra.mxu0 %v388
        %428 = vmatpush.bf16.msra.mxu0 %v386
        %429 = vmatpush.bf16.msra.mxu0 %v384
        %430 = vmatmul.bf16.gmra.mxu0 %v304
        %v431 = vpop.f32.mrf.mxu0
        %v432 = vadd.f32 %v418, %v431
        %v433 = vpop.f32.mrf.mxu0
        %v434 = vadd.f32 %v418, %v433
        %435 = vmatmul.bf16.gmra.mxu0 %v306
        %v436 = vpop.f32.mrf.mxu0
        %v437 = vadd.f32 %v418, %v436
        %v438 = vpop.f32.mrf.mxu0
        %v439 = vadd.f32 %v418, %v438
        %440 = vmatmul.bf16.gmra.mxu0 %v308
        %v441 = vpop.f32.mrf.mxu0
        %v442 = vadd.f32 %v418, %v441
        %v443 = vpop.f32.mrf.mxu0
        %v444 = vadd.f32 %v418, %v443
        %445 = vmatmul.bf16.gmra.mxu0 %v310
        %v446 = vpop.f32.mrf.mxu0
        %v447 = vadd.f32 %v418, %v446
        %v448 = vpop.f32.mrf.mxu0
        %v449 = vadd.f32 %v418, %v448
        %450 = vmatmul.bf16.gmra.mxu0 %v312
        %v451 = vpop.f32.mrf.mxu0
        %v452 = vadd.f32 %v418, %v451
        %v453 = vpop.f32.mrf.mxu0
        %v454 = vadd.f32 %v418, %v453
        %455 = vmatmul.bf16.gmra.mxu0 %v314
        %v456 = vpop.f32.mrf.mxu0
        %v457 = vadd.f32 %v418, %v456
        %v458 = vpop.f32.mrf.mxu0
        %v459 = vadd.f32 %v418, %v458
        %460 = vmatmul.bf16.gmra.mxu0 %v316
        %v461 = vpop.f32.mrf.mxu0
        %v462 = vadd.f32 %v418, %v461
        %v463 = vpop.f32.mrf.mxu0
        %v464 = vadd.f32 %v418, %v463
        %465 = vmatmul.bf16.gmra.mxu0 %v318
        %v466 = vpop.f32.mrf.mxu0
        %v467 = vadd.f32 %v418, %v466
        %v468 = vpop.f32.mrf.mxu0
        %v469 = vadd.f32 %v418, %v468
        %470 = vdwg.mxu0
        %471 = vmatpush.bf16.msra.mxu0 %v414
        %472 = vmatpush.bf16.msra.mxu0 %v412
        %473 = vmatpush.bf16.msra.mxu0 %v410
        %474 = vmatpush.bf16.msra.mxu0 %v408
        %475 = vmatpush.bf16.msra.mxu0 %v406
        %476 = vmatpush.bf16.msra.mxu0 %v404
        %477 = vmatpush.bf16.msra.mxu0 %v402
        %478 = vmatpush.bf16.msra.mxu0 %v400
        %479 = vmatmul.bf16.gmra.mxu0 %v305
        %v480 = vpop.f32.mrf.mxu0
        %v481 = vadd.f32 %v432, %v480
        %v482 = vpop.f32.mrf.mxu0
        %v483 = vadd.f32 %v434, %v482
        %484 = vmatmul.bf16.gmra.mxu0 %v307
        %v485 = vpop.f32.mrf.mxu0
        %v486 = vadd.f32 %v437, %v485
        %v487 = vpop.f32.mrf.mxu0
        %v488 = vadd.f32 %v439, %v487
        %489 = vmatmul.bf16.gmra.mxu0 %v309
        %v490 = vpop.f32.mrf.mxu0
        %v491 = vadd.f32 %v442, %v490
        %v492 = vpop.f32.mrf.mxu0
        %v493 = vadd.f32 %v444, %v492
        %494 = vmatmul.bf16.gmra.mxu0 %v311
        %v495 = vpop.f32.mrf.mxu0
        %v496 = vadd.f32 %v447, %v495
        %v497 = vpop.f32.mrf.mxu0
        %v498 = vadd.f32 %v449, %v497
        %499 = vmatmul.bf16.gmra.mxu0 %v313
        %v500 = vpop.f32.mrf.mxu0
        %v501 = vadd.f32 %v452, %v500
        %v502 = vpop.f32.mrf.mxu0
        %v503 = vadd.f32 %v454, %v502
        %504 = vmatmul.bf16.gmra.mxu0 %v315
        %v505 = vpop.f32.mrf.mxu0
        %v506 = vadd.f32 %v457, %v505
        %v507 = vpop.f32.mrf.mxu0
        %v508 = vadd.f32 %v459, %v507
        %509 = vmatmul.bf16.gmra.mxu0 %v317
        %v510 = vpop.f32.mrf.mxu0
        %v511 = vadd.f32 %v462, %v510
        %v512 = vpop.f32.mrf.mxu0
        %v513 = vadd.f32 %v464, %v512
        %514 = vmatmul.bf16.gmra.mxu0 %v319
        %v515 = vpop.f32.mrf.mxu0
        %v516 = vadd.f32 %v467, %v515
        %v517 = vpop.f32.mrf.mxu0
        %v518 = vadd.f32 %v469, %v517
        %519 = vdwg.mxu0
        %520 = vmatpush.bf16.msra.mxu0 %v399
        %521 = vmatpush.bf16.msra.mxu0 %v397
        %522 = vmatpush.bf16.msra.mxu0 %v395
        %523 = vmatpush.bf16.msra.mxu0 %v393
        %524 = vmatpush.bf16.msra.mxu0 %v391
        %525 = vmatpush.bf16.msra.mxu0 %v389
        %526 = vmatpush.bf16.msra.mxu0 %v387
        %527 = vmatpush.bf16.msra.mxu0 %v385
        %528 = vmatmul.bf16.gmra.mxu0 %v304
        %v529 = vpop.f32.mrf.mxu0
        %v530 = vadd.f32 %v419, %v529
        %v531 = vpop.f32.mrf.mxu0
        %v532 = vadd.f32 %v419, %v531
        %533 = vmatmul.bf16.gmra.mxu0 %v306
        %v534 = vpop.f32.mrf.mxu0
        %v535 = vadd.f32 %v419, %v534
        %v536 = vpop.f32.mrf.mxu0
        %v537 = vadd.f32 %v419, %v536
        %538 = vmatmul.bf16.gmra.mxu0 %v308
        %v539 = vpop.f32.mrf.mxu0
        %v540 = vadd.f32 %v419, %v539
        %v541 = vpop.f32.mrf.mxu0
        %v542 = vadd.f32 %v419, %v541
        %543 = vmatmul.bf16.gmra.mxu0 %v310
        %v544 = vpop.f32.mrf.mxu0
        %v545 = vadd.f32 %v419, %v544
        %v546 = vpop.f32.mrf.mxu0
        %v547 = vadd.f32 %v419, %v546
        %548 = vmatmul.bf16.gmra.mxu0 %v312
        %v549 = vpop.f32.mrf.mxu0
        %v550 = vadd.f32 %v419, %v549
        %v551 = vpop.f32.mrf.mxu0
        %v552 = vadd.f32 %v419, %v551
        %553 = vmatmul.bf16.gmra.mxu0 %v314
        %v554 = vpop.f32.mrf.mxu0
        %v555 = vadd.f32 %v419, %v554
        %v556 = vpop.f32.mrf.mxu0
        %v557 = vadd.f32 %v419, %v556
        %558 = vmatmul.bf16.gmra.mxu0 %v316
        %v559 = vpop.f32.mrf.mxu0
        %v560 = vadd.f32 %v419, %v559
        %v561 = vpop.f32.mrf.mxu0
        %v562 = vadd.f32 %v419, %v561
        %563 = vmatmul.bf16.gmra.mxu0 %v318
        %v564 = vpop.f32.mrf.mxu0
        %v565 = vadd.f32 %v419, %v564
        %v566 = vpop.f32.mrf.mxu0
        %v567 = vadd.f32 %v419, %v566
        %568 = vdwg.mxu0
        %569 = vmatpush.bf16.msra.mxu0 %v415
        %570 = vmatpush.bf16.msra.mxu0 %v413
        %571 = vmatpush.bf16.msra.mxu0 %v411
        %572 = vmatpush.bf16.msra.mxu0 %v409
        %573 = vmatpush.bf16.msra.mxu0 %v407
        %574 = vmatpush.bf16.msra.mxu0 %v405
        %575 = vmatpush.bf16.msra.mxu0 %v403
        %576 = vmatpush.bf16.msra.mxu0 %v401
        %577 = vmatmul.bf16.gmra.mxu0 %v305
        %v578 = vpop.f32.mrf.mxu0
        %v579 = vadd.f32 %v530, %v578
        %v580 = vpop.f32.mrf.mxu0
        %v581 = vadd.f32 %v532, %v580
        %582 = vmatmul.bf16.gmra.mxu0 %v307
        %v583 = vpop.f32.mrf.mxu0
        %v584 = vadd.f32 %v535, %v583
        %v585 = vpop.f32.mrf.mxu0
        %v586 = vadd.f32 %v537, %v585
        %587 = vmatmul.bf16.gmra.mxu0 %v309
        %v588 = vpop.f32.mrf.mxu0
        %v589 = vadd.f32 %v540, %v588
        %v590 = vpop.f32.mrf.mxu0
        %v591 = vadd.f32 %v542, %v590
        %592 = vmatmul.bf16.gmra.mxu0 %v311
        %v593 = vpop.f32.mrf.mxu0
        %v594 = vadd.f32 %v545, %v593
        %v595 = vpop.f32.mrf.mxu0
        %v596 = vadd.f32 %v547, %v595
        %597 = vmatmul.bf16.gmra.mxu0 %v313
        %v598 = vpop.f32.mrf.mxu0
        %v599 = vadd.f32 %v550, %v598
        %v600 = vpop.f32.mrf.mxu0
        %v601 = vadd.f32 %v552, %v600
        %602 = vmatmul.bf16.gmra.mxu0 %v315
        %v603 = vpop.f32.mrf.mxu0
        %v604 = vadd.f32 %v555, %v603
        %v605 = vpop.f32.mrf.mxu0
        %v606 = vadd.f32 %v557, %v605
        %607 = vmatmul.bf16.gmra.mxu0 %v317
        %v608 = vpop.f32.mrf.mxu0
        %v609 = vadd.f32 %v560, %v608
        %v610 = vpop.f32.mrf.mxu0
        %v611 = vadd.f32 %v562, %v610
        %612 = vmatmul.bf16.gmra.mxu0 %v319
        %v613 = vpop.f32.mrf.mxu0
        %v614 = vadd.f32 %v565, %v613
        %v615 = vpop.f32.mrf.mxu0
        %v616 = vadd.f32 %v567, %v615
        %617 = vdwg.mxu0
        %618 = vst [vmem:[%s266] sm:$0xff] %v481
        %619 = vst [vmem:[%s266 + $0x8] sm:$0xff] %v579
        %620 = vst [vmem:[%s266 + $0x10] sm:$0xff] %v483
        %621 = vst [vmem:[%s266 + $0x18] sm:$0xff] %v581
        %622 = vst [vmem:[%s266 + $0x20] sm:$0xff] %v486
        %623 = vst [vmem:[%s266 + $0x28] sm:$0xff] %v584
        %624 = vst [vmem:[%s266 + $0x30] sm:$0xff] %v488
        %625 = vst [vmem:[%s266 + $0x38] sm:$0xff] %v586
        %626 = vst [vmem:[%s266 + $0x40] sm:$0xff] %v491
        %627 = vst [vmem:[%s266 + $0x48] sm:$0xff] %v589
        %628 = vst [vmem:[%s266 + $0x50] sm:$0xff] %v493
        %629 = vst [vmem:[%s266 + $0x58] sm:$0xff] %v591
        %630 = vst [vmem:[%s266 + $0x60] sm:$0xff] %v496
        %631 = vst [vmem:[%s266 + $0x68] sm:$0xff] %v594
        %632 = vst [vmem:[%s266 + $0x70] sm:$0xff] %v498
        %633 = vst [vmem:[%s266 + $0x78] sm:$0xff] %v596
        %634 = vst [vmem:[%s266 + $0x80] sm:$0xff] %v501
        %635 = vst [vmem:[%s266 + $0x88] sm:$0xff] %v599
        %636 = vst [vmem:[%s266 + $0x90] sm:$0xff] %v503
        %637 = vst [vmem:[%s266 + $0x98] sm:$0xff] %v601
        %638 = vst [vmem:[%s266 + $0xa0] sm:$0xff] %v506
        %639 = vst [vmem:[%s266 + $0xa8] sm:$0xff] %v604
        %640 = vst [vmem:[%s266 + $0xb0] sm:$0xff] %v508
        %641 = vst [vmem:[%s266 + $0xb8] sm:$0xff] %v606
        %642 = vst [vmem:[%s266 + $0xc0] sm:$0xff] %v511
        %643 = vst [vmem:[%s266 + $0xc8] sm:$0xff] %v609
        %644 = vst [vmem:[%s266 + $0xd0] sm:$0xff] %v513
        %645 = vst [vmem:[%s266 + $0xd8] sm:$0xff] %v611
        %646 = vst [vmem:[%s266 + $0xe0] sm:$0xff] %v516
        %647 = vst [vmem:[%s266 + $0xe8] sm:$0xff] %v614
        %648 = vst [vmem:[%s266 + $0xf0] sm:$0xff] %v518
        %649 = vst [vmem:[%s266 + $0xf8] sm:$0xff] %v616
        %s650 = sand.u32 %s121, 1
        %s651 = scalar_lea.sflag [#allocation4], %s650
        %s652 = sand.u32 %s121, 1
        %s653 = smul.addr %s652, 256
        %s654 = scalar_lea.vmem [#allocation8], %s653
        // Predicated region
        $region45: #{tpu_custom_call.1} parent=31 // pred_check
          %p655 = pneg %p131
        $region46: #{tpu_custom_call.1} parent=31 // pred_check_branch
          %657 = sbr.rel (%p655) target = $region48
        $region47: #{tpu_custom_call.1} parent=31 // pred_region
          %s658 = smul.u32 16, %s25
          %s659 = smul.u32 2, %s26
          %661 = vsyncadd %s651, 0
          %s662 = smul.addr %s658, 6
          %s663 = sadd.s32 %s659, %s662
          %s664 = smul.addr %s663, 8
          %s665 = scalar_lea.hbm %s3, %s664
          %s666 = sshll.u32 %s654, 4
          %s667 = int_to_ptr.vmem [resolvable:$true] %s666
          %s668 = sshll.u32 %s665, 4
          %s669 = int_to_ptr.hbm [resolvable:$true] %s668
          %674 = dma.vmem_to_hbm [thread:$0]  %s667, 4096, %s669, %s651, 256, 768, 16
        $region48: #{tpu_custom_call.1} parent=31 // pred_fallthru
          _
      $region32: #{tpu_custom_call.1} parent=5 // pred_fallthru
        _
      %p675 = scmp.le.s32.totalorder 2, %s16
      // Predicated region
      $region49: #{tpu_custom_call.1} parent=5 // pred_check
        %p676 = pneg %p675
      $region50: #{tpu_custom_call.1} parent=5 // pred_check_branch
        %678 = sbr.rel (%p676) target = $region52
      $region51: #{tpu_custom_call.1} parent=5 // pred_region
        %s679 = ssub.s32 %s16, 2
        // Predicated region
        $region53: #{tpu_custom_call.1} parent=51 // pred_check
          %p680 = pneg %p137
        $region54: #{tpu_custom_call.1} parent=51 // pred_check_branch
          %682 = sbr.rel (%p680) target = $region56
        $region55: #{tpu_custom_call.1} parent=51 // pred_region
          %s683 = sand.u32 %s122, 1
          %s684 = scalar_lea.sflag [#allocation4], %s683
          %s685 = sand.u32 %s122, 1
          %s686 = smul.addr %s685, 256
          %s687 = scalar_lea.vmem [#allocation8], %s686
          %689 = dma.done %s684, 4096
        $region56: #{tpu_custom_call.1} parent=51 // pred_fallthru
          _
      $region52: #{tpu_custom_call.1} parent=5 // pred_fallthru
        _
    $region6: #{tpu_custom_call.1} parent=1 // loop_footer
      %s20 = sadd.s32 1, %s16
    $region7: #{tpu_custom_call.1} parent=1 // loop_footer_branch
      %15 = sbr.rel target = $region3
    $region8: #{tpu_custom_call.1} parent=1 // loop_exit
      _
    %690 = vsyncpa [#allocation3], 1
    %s691 = scalar_lea.sflag [#allocation3], 1
    %692 = vsyncpa %s691, 1
    %693 = vsyncpa [#allocation6], 1
    %s694 = scalar_lea.sflag [#allocation6], 1
    %695 = vsyncpa %s694, 1
    %696 = vsyncpa [#allocation4], 1
    %s697 = scalar_lea.sflag [#allocation4], 1
    %698 = vsyncpa %s697, 1

</llo_original>
